<compile_context>
chip_gen: v7x
topology: tpu7x:2x2x1
jax: 0.10.0
libtpu: 0.0.40
codegen_flags: <defaults>
</compile_context>

<pallas_src>
import math

import jax
import jax.numpy as jnp
import numpy as np
from jax.experimental import pallas as pl
from jax.experimental.pallas import tpu as pltpu


_DEFAULT_MAX_LANE_TILE = 4096   # 32 lane chunks; >=512 lanes is already ~85% of HBM roofline


def _vmem_limit_bytes():
    """Per-chip VMEM budget (review: derive from the chip; v7x has only 64 MiB/TC)."""
    try:
        cap = int(pltpu.get_tpu_info().vmem_capacity_bytes)
    except Exception:
        cap = 64 * 1024 * 1024          # conservative floor == v7x per-TC VMEM
    return int(min(cap * 3 // 4, 96 * 1024 * 1024))


def _pick_feature_tile(f_dim, b, n_members, itemsize_x, itemsize_tm,
                       vmem_limit, max_lane_tile=None):
    """Largest lane-dense (multiple-of-128) feature tile fitting the VMEM budget.
    Non-divisor tiles are allowed (cdiv grid + in-kernel tail masking)."""
    if f_dim % 128 != 0:
        # TODO(synk): a very large non-lane-aligned F would need a masked oversized
        # block; use the always-legal full-width block instead.
        return f_dim
    per_lane = b * 2 * (itemsize_x + itemsize_tm)        # double-buffered x + seg tiles
    fixed = n_members * b * 128 * 4 + 2 * 8 * 128 * 4    # acc scratch + out buffers
    cap = max(128, ((vmem_limit - fixed) // max(per_lane, 1)) // 128 * 128)
    ceiling = max_lane_tile if max_lane_tile is not None else _DEFAULT_MAX_LANE_TILE
    cap = min(cap, max(128, (ceiling // 128) * 128))
    return int(min(cap, f_dim))


def _make_diversity_kernel(b, tile_f, f_dim):
    lane_aligned = (tile_f % 128 == 0)
    needs_mask = lane_aligned and (f_dim % tile_f != 0)
    n_lane_chunks = tile_f // 128

    def kernel(start_ref, x_ref, seg_ref, out_ref, acc_ref):
        # start_ref: (1,) SMEM scalar prefetch (consumed only by the index_maps)
        # x_ref:   (B, tile_F) VMEM  (same block for the whole inner member loop)
        # seg_ref: (1, B, tile_F) VMEM train_means segment of member `mi`
        # out_ref: (1, 8, 128) per-member sum-of-squares output block
        # acc_ref: (M, B, 128) f32 scratch; one vreg-row accumulator per member
        del start_ref
        fi = pl.program_id(0)            # feature chunk (outer)
        mi = pl.program_id(1)            # ensemble member (inner)
        nf = pl.num_programs(0)

        x = x_ref[...].astype(jnp.float32)       # (B, tile_F)
        s = seg_ref[0].astype(jnp.float32)       # (B, tile_F)
        d = x - s
        if needs_mask:                           # partial tail chunk: zero invalid lanes
            lane = jax.lax.broadcasted_iota(jnp.int32, d.shape, 1)
            d = jnp.where(lane < (f_dim - fi * tile_f), d, 0.0)
        dd = d * d                               # pure VPU

        if lane_aligned:
            # Fold lane chunks into one (B, 128) row: VPU adds only, no XLU per step.
            part = dd[:, 0:128]
            for c in range(1, n_lane_chunks):
                part = part + dd[:, c * 128:(c + 1) * 128]

            @pl.when(fi == 0)
            def _init():
                acc_ref[mi] = part

            @pl.when(fi != 0)
            def _accumulate():
                acc_ref[mi] = acc_ref[mi] + part

            @pl.when(fi == nf - 1)
            def _finalize():
                ss = jnp.sum(acc_ref[mi])        # single cross-lane reduce per member
                out_ref[...] = jnp.full(out_ref.shape, ss, jnp.float32)
        else:
            # F not lane-aligned => single full-width chunk (nf == 1).
            out_ref[...] = jnp.full(out_ref.shape, jnp.sum(dd), jnp.float32)

    return kernel


def diversity_loss(input_x, target, train_means, batch_number, batch_size,
                   diversity_factor, *, max_lane_tile=None):
    """Pallas implementation of DiversityLoss.forward.

    input_x, target : (B, ...) arrays of identical shape (any float dtype)
    train_means     : (M, N_total, ...) stacked ensemble_member[i].train_means
    batch_number    : python int or scalar int array
    batch_size      : python int (nominal training batch size)
    Returns a (1, 1) float32 array (matches the PyTorch output shape).
    """
    b = input_x.shape[0]
    n_members = train_means.shape[0]
    n_total = train_means.shape[1]

    # Metadata-only reshapes (no copy, no cast).
    x2 = input_x.reshape(b, -1)
    t2 = target.reshape(b, -1)
    f_dim = x2.shape[1]
    tm3 = train_means.reshape(n_members, n_total, -1)
    assert tm3.shape[2] == f_dim, "train_means feature size must match input"
    if isinstance(batch_number, (int, np.integer)):
        assert batch_number * batch_size + b <= n_total, "batch segment out of range"

    vmem_limit = _vmem_limit_bytes()
    tile_f = _pick_feature_tile(f_dim, b, n_members,
                                jnp.dtype(x2.dtype).itemsize,
                                jnp.dtype(tm3.dtype).itemsize,
                                vmem_limit, max_lane_tile)
    n_f = pl.cdiv(f_dim, tile_f)

    # Fast path: address the batch segment of train_means directly in HBM via a
    # scalar-prefetched block offset (no sliced copy materialized).
    aligned = (batch_size % b == 0) and (b % 8 == 0 or b == n_total)
    if aligned:
        seg_arg = tm3
        start_block = (jnp.asarray(batch_number, jnp.int32)
                       * jnp.int32(batch_size // b)).reshape(1)
    else:
        # TODO(synk): misaligned / partial last batches fall back to a wrapper-side
        # dynamic_slice copy of the segment (correct, but extra HBM traffic).
        start_row = batch_number * batch_size
        seg_arg = jax.lax.dynamic_slice_in_dim(tm3, start_row, b, axis=1)
        start_block = jnp.zeros((1,), jnp.int32)

    kernel = _make_diversity_kernel(b, tile_f, f_dim)

    grid_spec = pltpu.PrefetchScalarGridSpec(
        num_scalar_prefetch=1,
        # Feature chunks OUTER, members INNER: input's block index depends only
        # on the outer axis, so its DMA is skipped for the whole member loop.
        grid=(n_f, n_members),
        in_specs=[
            pl.BlockSpec((b, tile_f), lambda fi, mi, start: (0, fi)),          # input
            pl.BlockSpec((1, b, tile_f),
                         lambda fi, mi, start: (mi, start[0], fi)),            # train_means
        ],
        out_specs=pl.BlockSpec((1, 8, 128), lambda fi, mi, start: (mi, 0, 0)),
        scratch_shapes=[pltpu.VMEM((n_members, b, 128), jnp.float32)],
    )

    ss_out = pl.pallas_call(
        kernel,
        out_shape=jax.ShapeDtypeStruct((n_members, 8, 128), jnp.float32),
        grid_spec=grid_spec,
        # TODO(synk): on v7x a feature-axis core split (per-core partial sums
        # combined in the wrapper) would balance better than a 'parallel'
        # member axis of size M=3; both axes kept 'arbitrary' for correctness.
        compiler_params=pltpu.CompilerParams(
            dimension_semantics=("arbitrary", "arbitrary"),
            vmem_limit_bytes=vmem_limit),
    )(start_block, x2, seg_arg)

    # MSE stays outside the kernel: one fused mem-bound XLA pass, and target is
    # never pushed through the Pallas pipeline M times.
    mse = jnp.mean((x2.astype(jnp.float32) - t2.astype(jnp.float32)) ** 2)

    norms = jnp.sqrt(ss_out[:, 0, 0])                                   # (M,)
    norm_results = jnp.sum(norms) * jnp.float32(math.sqrt(2.0) / 2.0) / jnp.float32(b)
    loss = mse + jnp.float32(diversity_factor) * norm_results / jnp.float32(n_members)
    return jnp.reshape(loss, (1, 1)).astype(jnp.float32)


def _reference_loss(input_x, target, train_means, batch_number, batch_size,
                    diversity_factor):
    # Pure-JAX reference mirroring the PyTorch forward exactly.
    b = input_x.shape[0]
    m = train_means.shape[0]
    x2 = input_x.reshape(b, -1).astype(jnp.float32)
    t2 = target.reshape(b, -1).astype(jnp.float32)
    tm3 = train_means.reshape(m, train_means.shape[1], -1)
    start = batch_number * batch_size
    seg = jax.lax.dynamic_slice_in_dim(tm3, start, b, axis=1).astype(jnp.float32)

    mse = jnp.mean((x2 - t2) ** 2)
    norms = jnp.sqrt(jnp.sum((x2[None] - seg) ** 2, axis=(1, 2)))        # (M,)
    norm_results = jnp.sum(norms) * (math.sqrt(2.0) / 2.0) / b
    loss = mse + diversity_factor * norm_results / m
    return jnp.full((1, 1), loss, dtype=jnp.float32)


if __name__ == "__main__":
    key = jax.random.PRNGKey(0)
    k_in, k_tg, k_tm, k_in2, k_tg2, k_tm2 = jax.random.split(key, 6)

    # Case 1: B=8, features (4, 128) -> F=512 (lane-dense, two 256-lane chunks),
    #         M=3 members over N_total=32, aligned fast path (rows 8..16).
    B, C, D = 8, 4, 128
    M, N_TOTAL = 3, 32
    input_x = jax.random.normal(k_in, (B, C, D), dtype=jnp.float32)
    target = jax.random.normal(k_tg, (B, C, D), dtype=jnp.float32)
    train_means = jax.random.normal(k_tm, (M, N_TOTAL, C, D), dtype=jnp.float32)

    out1 = jax.block_until_ready(
        diversity_loss(input_x, target, train_means, 1, 8, 0.3,
                       max_lane_tile=256))     # forces 2 feature chunks
    ref1 = jax.block_until_ready(
        _reference_loss(input_x, target, train_means, 1, 8, 0.3))
    np.testing.assert_allclose(np.asarray(out1), np.asarray(ref1),
                               rtol=1e-4, atol=1e-5)
    assert out1.shape == (1, 1)

    # Case 2: F=384 with 256-lane tiles -> exercises the masked partial tail chunk.
    C2 = 3
    input_x2 = jax.random.normal(k_in2, (B, C2, D), dtype=jnp.float32)
    target2 = jax.random.normal(k_tg2, (B, C2, D), dtype=jnp.float32)
    train_means2 = jax.random.normal(k_tm2, (M, N_TOTAL, C2, D), dtype=jnp.float32)

    out2 = jax.block_until_ready(
        diversity_loss(input_x2, target2, train_means2, 2, 8, 0.5,
                       max_lane_tile=256))
    ref2 = jax.block_until_ready(
        _reference_loss(input_x2, target2, train_means2, 2, 8, 0.5))
    np.testing.assert_allclose(np.asarray(out2), np.asarray(ref2),
                               rtol=1e-4, atol=1e-5)

    # Case 3: batch start not B-block aligned -> wrapper-slice fallback path.
    out3 = jax.block_until_ready(
        diversity_loss(input_x, target, train_means, 2, 10, 0.3,
                       max_lane_tile=256))
    ref3 = jax.block_until_ready(
        _reference_loss(input_x, target, train_means, 2, 10, 0.3))
    np.testing.assert_allclose(np.asarray(out3), np.asarray(ref3),
                               rtol=1e-4, atol=1e-5)

    print("KERNEL_OK")
</pallas_src>

<mosaic_0001>
module attributes {stable_mosaic.version = 11 : i64} {
  func.func @kernel(%arg0: i32, %arg1: i32, %arg2: memref<1xi32, #tpu.memory_space<smem>>, %arg3: memref<8x256xf32, #tpu.memory_space<vmem>>, %arg4: memref<1x8x256xf32, #tpu.memory_space<vmem>>, %arg5: memref<1x8x128xf32, #tpu.memory_space<vmem>>, %arg6: memref<3x8x128xf32, #tpu.memory_space<vmem>>) attributes {dimension_semantics = [#tpu.dimension_semantics<arbitrary>, #tpu.dimension_semantics<arbitrary>], iteration_bounds = array<i64: 2, 3>, scalar_prefetch = 1 : i64, scratch_operands = 1 : i64, tpu.core_type = #tpu.core_type<tc>, window_params = [{transform_indices = @transform_0, window_bounds = array<i64: 8, 256>}, {transform_indices = @transform_1, window_bounds = array<i64: 1, 8, 256>}, {transform_indices = @transform_2, window_bounds = array<i64: 1, 8, 128>}]} {
    %c0 = arith.constant 0 : index
    %c0_0 = arith.constant 0 : index
    %0 = vector.load %arg3[%c0, %c0_0] : memref<8x256xf32, #tpu.memory_space<vmem>>, vector<8x256xf32>
    %c0_1 = arith.constant 0 : index
    %c0_2 = arith.constant 0 : index
    %c0_3 = arith.constant 0 : index
    %1 = vector.load %arg4[%c0_1, %c0_2, %c0_3] : memref<1x8x256xf32, #tpu.memory_space<vmem>>, vector<1x8x256xf32>
    %2 = vector.shape_cast %1 : vector<1x8x256xf32> to vector<8x256xf32>
    %3 = arith.subf %0, %2 : vector<8x256xf32>
    %4 = arith.mulf %3, %3 : vector<8x256xf32>
    %5 = vector.extract_strided_slice %4 {offsets = [0, 0], sizes = [8, 128], strides = [1, 1]} : vector<8x256xf32> to vector<8x128xf32>
    %6 = vector.extract_strided_slice %4 {offsets = [0, 128], sizes = [8, 128], strides = [1, 1]} : vector<8x256xf32> to vector<8x128xf32>
    %7 = arith.addf %5, %6 : vector<8x128xf32>
    %c0_i32 = arith.constant 0 : i32
    %8 = arith.cmpi eq, %arg0, %c0_i32 : i32
    %9 = arith.extui %8 : i1 to i32
    %c0_i32_4 = arith.constant 0 : i32
    %10 = arith.cmpi ne, %9, %c0_i32_4 : i32
    scf.if %10 {
      %17 = arith.index_cast %arg1 : i32 to index
      %c0_8 = arith.constant 0 : index
      %c0_9 = arith.constant 0 : index
      %18 = vector.load %arg6[%17, %c0_8, %c0_9] : memref<3x8x128xf32, #tpu.memory_space<vmem>>, vector<1x8x128xf32>
      %19 = vector.shape_cast %18 : vector<1x8x128xf32> to vector<8x128xf32>
      %20 = vector.shape_cast %7 : vector<8x128xf32> to vector<1x8x128xf32>
      tpu.vector_store %arg6[%17, %c0_8, %c0_9], %20 {strides = array<i32>} : memref<3x8x128xf32, #tpu.memory_space<vmem>>, vector<1x8x128xf32>,
    } else {
    }
    %c0_i32_5 = arith.constant 0 : i32
    %11 = arith.cmpi ne, %arg0, %c0_i32_5 : i32
    %12 = arith.extui %11 : i1 to i32
    %c0_i32_6 = arith.constant 0 : i32
    %13 = arith.cmpi ne, %12, %c0_i32_6 : i32
    scf.if %13 {
      %17 = arith.index_cast %arg1 : i32 to index
      %c0_8 = arith.constant 0 : index
      %c0_9 = arith.constant 0 : index
      %18 = vector.load %arg6[%17, %c0_8, %c0_9] : memref<3x8x128xf32, #tpu.memory_space<vmem>>, vector<1x8x128xf32>
      %19 = vector.shape_cast %18 : vector<1x8x128xf32> to vector<8x128xf32>
      %20 = arith.addf %19, %7 : vector<8x128xf32>
      %21 = arith.index_cast %arg1 : i32 to index
      %c0_10 = arith.constant 0 : index
      %c0_11 = arith.constant 0 : index
      %22 = vector.load %arg6[%21, %c0_10, %c0_11] : memref<3x8x128xf32, #tpu.memory_space<vmem>>, vector<1x8x128xf32>
      %23 = vector.shape_cast %22 : vector<1x8x128xf32> to vector<8x128xf32>
      %24 = vector.shape_cast %20 : vector<8x128xf32> to vector<1x8x128xf32>
      tpu.vector_store %arg6[%21, %c0_10, %c0_11], %24 {strides = array<i32>} : memref<3x8x128xf32, #tpu.memory_space<vmem>>, vector<1x8x128xf32>,
    } else {
    }
    %c1_i32 = arith.constant 1 : i32
    %14 = arith.cmpi eq, %arg0, %c1_i32 : i32
    %15 = arith.extui %14 : i1 to i32
    %c0_i32_7 = arith.constant 0 : i32
    %16 = arith.cmpi ne, %15, %c0_i32_7 : i32
    scf.if %16 {
      %17 = arith.index_cast %arg1 : i32 to index
      %c0_8 = arith.constant 0 : index
      %c0_9 = arith.constant 0 : index
      %18 = vector.load %arg6[%17, %c0_8, %c0_9] : memref<3x8x128xf32, #tpu.memory_space<vmem>>, vector<1x8x128xf32>
      %19 = vector.shape_cast %18 : vector<1x8x128xf32> to vector<8x128xf32>
      %20 = vector.shape_cast %19 : vector<8x128xf32> to vector<1x8x128xf32>
      %cst = arith.constant dense<0.000000e+00> : vector<1xf32>
      %21 = vector.multi_reduction <add>, %20, %cst [1, 2] : vector<1x8x128xf32> to vector<1xf32>
      %22 = vector.shape_cast %21 : vector<1xf32> to vector<1x1x1xf32>
      %23 = vector.extract %22[0, 0, 0] : f32 from vector<1x1x1xf32>
      %24 = vector.broadcast %23 : f32 to vector<1x8x128xf32>
      %c0_10 = arith.constant 0 : index
      %c0_11 = arith.constant 0 : index
      %c0_12 = arith.constant 0 : index
      %25 = vector.load %arg5[%c0_10, %c0_11, %c0_12] : memref<1x8x128xf32, #tpu.memory_space<vmem>>, vector<1x8x128xf32>
      tpu.vector_store %arg5[%c0_10, %c0_11, %c0_12], %24 {strides = array<i32>} : memref<1x8x128xf32, #tpu.memory_space<vmem>>, vector<1x8x128xf32>,
    } else {
    }
    return
  }
  func.func @transform_0(%arg0: i32, %arg1: i32, %arg2: memref<1xi32, #tpu.memory_space<smem>>) -> (i32, i32) {
    %c0_i32 = arith.constant 0 : i32
    %c0_i32_0 = arith.constant 0 : i32
    return %c0_i32, %arg0 : i32, i32
  }
  func.func @transform_1(%arg0: i32, %arg1: i32, %arg2: memref<1xi32, #tpu.memory_space<smem>>) -> (i32, i32, i32) {
    %c0 = arith.constant 0 : index
    %0 = memref.load %arg2[%c0] : memref<1xi32, #tpu.memory_space<smem>>
    %c0_i32 = arith.constant 0 : i32
    return %arg1, %0, %arg0 : i32, i32, i32
  }
  func.func @transform_2(%arg0: i32, %arg1: i32, %arg2: memref<1xi32, #tpu.memory_space<smem>>) -> (i32, i32, i32) {
    %c0_i32 = arith.constant 0 : i32
    %c0_i32_0 = arith.constant 0 : i32
    %c0_i32_1 = arith.constant 0 : i32
    return %arg1, %c0_i32, %c0_i32_0 : i32, i32, i32
  }
}

</mosaic_0001>

<llo_original>
// kernel: tpu_custom_call.1
$region0: #{tpu_custom_call.1}
  #allocation0 [shape = 'u32[]', space=smem, size = 0x4, offset = 0x4, fixed_abs, tag = 'smem constant byte address 0x4 - core index']
  #allocation1 [shape = 'u32[144,128]{1,0:T(1,128)}', space=vmem, size = 0x12000, scoped, tag = 'internal scratch']
  #allocation2 [shape = 'f32[3,8,128]{2,1,0:T(8,128)}', space=vmem, size = 0x3000, scoped, tag = 'scratch operand']
  #allocation3 [shape = 's32[1]{0}', space=sflag, size = 0x4, scoped, tag = 'scoped memory for tpu_custom_call.1']
  #allocation4 [shape = 's32[1]{0:T(128)S(6)}', space=smem, size = 0x200, scoped, tag = 'prefetched SMEM operand 0']
  %s0 = inlined_call_operand.<no memory space> [shape: s32[1], index: 0, kind: input, shape index: {}]
  %s1 = inlined_call_operand.hbm [shape: f32[8,512], index: 1, kind: input, shape index: {}]
  %s2 = inlined_call_operand.hbm [shape: f32[3,32,512], index: 2, kind: input, shape index: {}]
  %s3 = inlined_call_operand.hbm [shape: f32[3,8,128], index: 3, kind: output, shape index: {}]
  %s4 = sld [smem:[#allocation0]]
  $region61: #{tpu_custom_call.1} parent=0
    _
  %s6 = ssub.s32 1, %s4
  %s7 = scalar_select 0, %s6, %s4
  %8 = sst [smem:[#allocation4]] %s0
  $region1: #{tpu_custom_call.1} parent=0
    #allocation5 [shape = 'u8[16384]{0}', space=vmem, size = 0x4000, scoped, tag = 'input window, operand 1']
    #allocation6 [shape = 's32[2]{0}', space=sflag, size = 0x8, scoped, tag = 'scoped memory for tpu_custom_call.1']
    #allocation7 [shape = 's32[2]{0}', space=sflag, size = 0x8, scoped, tag = 'scoped memory for tpu_custom_call.1']
    #allocation8 [shape = 'u8[16384]{0}', space=vmem, size = 0x4000, scoped, tag = 'input window, operand 2']
    #allocation9 [shape = 's32[2]{0}', space=sflag, size = 0x8, scoped, tag = 'scoped memory for tpu_custom_call.1']
    #allocation10 [shape = 'u8[8192]{0}', space=vmem, size = 0x2000, scoped, tag = 'output window, operand 0']
    %9 = vsyncpa [#allocation6], 0
    %s10 = scalar_lea.sflag [#allocation6], 1
    %11 = vsyncpa %s10, 0
    %12 = vsyncpa [#allocation9], 0
    %s13 = scalar_lea.sflag [#allocation9], 1
    %14 = vsyncpa %s13, 0
    %15 = vsyncpa [#allocation7], 0
    %s16 = scalar_lea.sflag [#allocation7], 1
    %17 = vsyncpa %s16, 0
    loop: start=0, step=1, limit=8
    $region2: #{tpu_custom_call.1} parent=1 // loop_pre_header
      _
    $region3: #{tpu_custom_call.1} parent=1 // loop_header
      %s19 = sphi 0, %s23
      %p20 = scmp.ge.s32.totalorder %s19, 8
      %s26 = sphi 0, %s38
      %s27 = sphi 0, %s34
      %s28 = sphi 0, %s26
      %s29 = sphi 0, %s27
      %s30 = sphi 0, %s28
      %s31 = sphi 0, %s29
      %s41 = sphi 0, %s43
      %s44 = sphi 0, %s41
      %s45 = sphi 0, %s44
      %s61 = sphi 0, %s45
      %s73 = sphi 0, %s75
      %s76 = sphi 0, %s73
      %s77 = sphi 0, %s76
      %s93 = sphi 0, %s77
      %s99 = sphi 0, %s101
      %s102 = sphi 0, %s99
      %s103 = sphi 0, %s102
      %s119 = sphi 0, %s103
    $region4: #{tpu_custom_call.1} parent=1 // loop_header_branch
      %22 = sbr.rel (%p20) target = $region8
    $region5: #{tpu_custom_call.1} parent=1 // loop_body
      %s24 = ssub.s32 %s19, 1
      %s25 = ssub.s32 %s19, 2
      %s32 = sadd.s32 1, %s27
      %p33 = scmp.ge.s32.totalorder %s32, 3
      %s34 = scalar_select %p33, 0, %s32
      %s35 = sadd.s32 1, %s26
      %s36 = scalar_select %p33, %s35, %s26
      %p37 = scmp.ge.s32.totalorder %s36, 2
      %s38 = scalar_select %p37, 0, %s36
      %s39 = ssub.s32 %s26, %s38
      %p40 = scmp.eq.s32.totalorder %s39, 0
      %s42 = sadd.s32 %s41, 1
      %s43 = scalar_select %p40, %s41, %s42
      %p46 = pneg %p40
      %p47 = scmp.eq.s32.totalorder %s19, 5
      %p48 = por %p46, %p47
      %p49 = scmp.ne.s32.totalorder %s41, %s44
      %p50 = scmp.eq.s32.totalorder %s19, 0
      %p51 = por %p49, %p50
      %p52 = scmp.ne.s32.totalorder %s41, %s44
      %p53 = scmp.eq.s32.totalorder %s24, 5
      %p54 = por %p52, %p53
      %p55 = scmp.ne.s32.totalorder %s44, %s45
      %p56 = scmp.eq.s32.totalorder %s24, 0
      %p57 = por %p55, %p56
      %p58 = scmp.ne.s32.totalorder %s44, %s45
      %p59 = scmp.eq.s32.totalorder %s25, 5
      %p60 = por %p58, %p59
      %p62 = scmp.ne.s32.totalorder %s45, %s61
      %p63 = scmp.eq.s32.totalorder %s25, 0
      %p64 = por %p62, %p63
      %s65 = sld [smem:[#allocation4]]
      %s66 = sld [smem:[#allocation4]]
      %s67 = ssub.s32 %s27, %s34
      %s68 = ssub.s32 %s65, %s66
      %s69 = sor.u32 %s67, %s68
      %s70 = ssub.s32 %s26, %s38
      %s71 = sor.u32 %s69, %s70
      %p72 = scmp.eq.s32.totalorder %s71, 0
      %s74 = sadd.s32 %s73, 1
      %s75 = scalar_select %p72, %s73, %s74
      %p78 = pneg %p72
      %p79 = scmp.eq.s32.totalorder %s19, 5
      %p80 = por %p78, %p79
      %p81 = scmp.ne.s32.totalorder %s73, %s76
      %p82 = scmp.eq.s32.totalorder %s19, 0
      %p83 = por %p81, %p82
      %p84 = scmp.ne.s32.totalorder %s73, %s76
      %p85 = scmp.eq.s32.totalorder %s24, 5
      %p86 = por %p84, %p85
      %p87 = scmp.ne.s32.totalorder %s76, %s77
      %p88 = scmp.eq.s32.totalorder %s24, 0
      %p89 = por %p87, %p88
      %p90 = scmp.ne.s32.totalorder %s76, %s77
      %p91 = scmp.eq.s32.totalorder %s25, 5
      %p92 = por %p90, %p91
      %p94 = scmp.ne.s32.totalorder %s77, %s93
      %p95 = scmp.eq.s32.totalorder %s25, 0
      %p96 = por %p94, %p95
      %s97 = ssub.s32 %s27, %s34
      %p98 = scmp.eq.s32.totalorder %s97, 0
      %s100 = sadd.s32 %s99, 1
      %s101 = scalar_select %p98, %s99, %s100
      %p104 = pneg %p98
      %p105 = scmp.eq.s32.totalorder %s19, 5
      %p106 = por %p104, %p105
      %p107 = scmp.ne.s32.totalorder %s99, %s102
      %p108 = scmp.eq.s32.totalorder %s19, 0
      %p109 = por %p107, %p108
      %p110 = scmp.ne.s32.totalorder %s99, %s102
      %p111 = scmp.eq.s32.totalorder %s24, 5
      %p112 = por %p110, %p111
      %p113 = scmp.ne.s32.totalorder %s102, %s103
      %p114 = scmp.eq.s32.totalorder %s24, 0
      %p115 = por %p113, %p114
      %p116 = scmp.ne.s32.totalorder %s102, %s103
      %p117 = scmp.eq.s32.totalorder %s25, 5
      %p118 = por %p116, %p117
      %p120 = scmp.ne.s32.totalorder %s103, %s119
      %p121 = scmp.eq.s32.totalorder %s25, 0
      %p122 = por %p120, %p121
      %p123 = scmp.le.s32.totalorder 1, %s19
      %p124 = scmp.lt.s32.totalorder %s19, 7
      %p125 = pnand %p123, %p124
      %p126 = pneg %p125
      // Predicated region
      $region9: #{tpu_custom_call.1} parent=5 // pred_check
        _
      $region10: #{tpu_custom_call.1} parent=5 // pred_check_branch
        %128 = sbr.rel (%p125) target = $region12
      $region11: #{tpu_custom_call.1} parent=5 // pred_region
        %s129 = ssub.s32 %s19, 1
      $region12: #{tpu_custom_call.1} parent=5 // pred_fallthru
        _
      %p130 = scmp.lt.s32.totalorder %s19, 6
      // Predicated region
      $region13: #{tpu_custom_call.1} parent=5 // pred_check
        %p131 = pneg %p130
      $region14: #{tpu_custom_call.1} parent=5 // pred_check_branch
        %133 = sbr.rel (%p131) target = $region16
      $region15: #{tpu_custom_call.1} parent=5 // pred_region
        // Predicated region
        $region17: #{tpu_custom_call.1} parent=15 // pred_check
          %p134 = pneg %p51
        $region18: #{tpu_custom_call.1} parent=15 // pred_check_branch
          %136 = sbr.rel (%p134) target = $region20
        $region19: #{tpu_custom_call.1} parent=15 // pred_region
          %s137 = sand.u32 %s41, 1
          %s138 = scalar_lea.sflag [#allocation6], %s137
          %s139 = sand.u32 %s41, 1
          %s140 = smul.addr %s139, 16
          %s141 = scalar_lea.vmem [#allocation5], %s140
          %s142 = smul.u32 2, %s26
          %s144 = ssub.s32 256, 256
          %145 = vsyncadd %s138, %s144
          %s146 = smul.addr %s142, 128
          %s147 = scalar_lea.hbm %s1, %s146
          %s149 = sshll.u32 %s141, 4
          %s150 = int_to_ptr.vmem [resolvable:$true] %s149
          %152 = dma.hbm_to_vmem [thread:$0]  %s147, 256, %s150, %s138
        $region20: #{tpu_custom_call.1} parent=15 // pred_fallthru
          _
        // Predicated region
        $region21: #{tpu_custom_call.1} parent=15 // pred_check
          %p153 = pneg %p83
        $region22: #{tpu_custom_call.1} parent=15 // pred_check_branch
          %155 = sbr.rel (%p153) target = $region24
        $region23: #{tpu_custom_call.1} parent=15 // pred_region
          %s156 = sand.u32 %s73, 1
          %s157 = scalar_lea.sflag [#allocation9], %s156
          %s158 = sand.u32 %s73, 1
          %s159 = smul.addr %s158, 16
          %s160 = scalar_lea.vmem [#allocation8], %s159
          %s161 = sld [smem:[#allocation4]]
          %s162 = smul.u32 2, %s26
          %s164 = ssub.s32 256, 256
          %165 = vsyncadd %s157, %s164
          %s166 = smul.addr %s161, 4
          %s167 = sadd.s32 %s162, %s166
          %s168 = smul.addr %s27, 16
          %s169 = sadd.s32 %s167, %s168
          %s170 = smul.addr %s169, 128
          %s171 = scalar_lea.hbm %s2, %s170
          %s173 = sshll.u32 %s160, 4
          %s174 = int_to_ptr.vmem [resolvable:$true] %s173
          %176 = dma.hbm_to_vmem [thread:$0]  %s171, 256, %s174, %s157
        $region24: #{tpu_custom_call.1} parent=15 // pred_fallthru
          _
      $region16: #{tpu_custom_call.1} parent=5 // pred_fallthru
        _
      %p177 = scmp.le.s32.totalorder 1, %s19
      %p178 = scmp.lt.s32.totalorder %s19, 7
      %p179 = pnand %p177, %p178
      %p180 = pneg %p179
      // Predicated region
      $region25: #{tpu_custom_call.1} parent=5 // pred_check
        _
      $region26: #{tpu_custom_call.1} parent=5 // pred_check_branch
        %182 = sbr.rel (%p179) target = $region28
      $region27: #{tpu_custom_call.1} parent=5 // pred_region
        %s183 = ssub.s32 %s19, 1
        %s184 = sand.u32 %s44, 1
        %s185 = scalar_lea.sflag [#allocation6], %s184
        %s186 = sand.u32 %s44, 1
        %s187 = smul.addr %s186, 16
        %s188 = scalar_lea.vmem [#allocation5], %s187
        // Predicated region
        $region29: #{tpu_custom_call.1} parent=27 // pred_check
          %p189 = pneg %p57
        $region30: #{tpu_custom_call.1} parent=27 // pred_check_branch
          %191 = sbr.rel (%p189) target = $region32
        $region31: #{tpu_custom_call.1} parent=27 // pred_region
          %192 = dma.done %s185, 256
        $region32: #{tpu_custom_call.1} parent=27 // pred_fallthru
          _
        %s193 = sand.u32 %s76, 1
        %s194 = scalar_lea.sflag [#allocation9], %s193
        %s195 = sand.u32 %s76, 1
        %s196 = smul.addr %s195, 16
        %s197 = scalar_lea.vmem [#allocation8], %s196
        // Predicated region
        $region33: #{tpu_custom_call.1} parent=27 // pred_check
          %p198 = pneg %p89
        $region34: #{tpu_custom_call.1} parent=27 // pred_check_branch
          %200 = sbr.rel (%p198) target = $region36
        $region35: #{tpu_custom_call.1} parent=27 // pred_region
          %201 = dma.done %s194, 256
        $region36: #{tpu_custom_call.1} parent=27 // pred_fallthru
          _
        %s202 = sand.u32 %s44, 1
        %s203 = scalar_lea.sflag [#allocation6], %s202
        %s204 = sand.u32 %s44, 1
        %s205 = smul.addr %s204, 16
        %s206 = scalar_lea.vmem [#allocation5], %s205
        %p207 = pneg %p57
        %p208 = pneg %p54
        %s209 = sand.u32 %s76, 1
        %s210 = scalar_lea.sflag [#allocation9], %s209
        %s211 = sand.u32 %s76, 1
        %s212 = smul.addr %s211, 16
        %s213 = scalar_lea.vmem [#allocation8], %s212
        %p214 = pneg %p89
        %p215 = pneg %p86
        %p216 = pneg %p115
        %p217 = pneg %p112
        %s218 = sand.u32 %s102, 1
        %s219 = scalar_lea.sflag [#allocation7], %s218
        %s220 = sand.u32 %s102, 1
        %s221 = smul.addr %s220, 8
        %s222 = scalar_lea.vmem [#allocation10], %s221
        %s223 = smul.u32 2, %s28
        %s224 = sld [smem:[#allocation4]]
        %s225 = smul.u32 2, %s28
        %v226 = vld [vmem:[%s188] sm:$0xff]
        %v227 = vld [vmem:[%s188 + $0x8] sm:$0xff]
        %v228 = vld [vmem:[%s197] sm:$0xff]
        %v229 = vld [vmem:[%s197 + $0x8] sm:$0xff]
        %v230 = vsub.f32 %v226, %v228
        %v231 = vsub.f32 %v227, %v229
        %v232 = vmul.f32 %v230, %v230
        %v233 = vmul.f32 %v231, %v231
        %v234 = vadd.f32 %v232, %v233
        %p235 = scmp.eq.s32.totalorder %s28, 0
        // Predicated region
        $region37: #{tpu_custom_call.1} parent=27 // pred_check
          %p236 = pneg %p235
        $region38: #{tpu_custom_call.1} parent=27 // pred_check_branch
          %238 = sbr.rel (%p236) target = $region40
        $region39: #{tpu_custom_call.1} parent=27 // pred_region
          %s239 = smul.u32 %s29, 8
          %s240 = scalar_lea.vmem [#allocation2], %s239
          %241 = vst [vmem:[%s240] sm:$0xff] %v234
        $region40: #{tpu_custom_call.1} parent=27 // pred_fallthru
          _
        %p242 = scmp.ne.s32.totalorder %s28, 0
        // Predicated region
        $region41: #{tpu_custom_call.1} parent=27 // pred_check
          %p243 = pneg %p242
        $region42: #{tpu_custom_call.1} parent=27 // pred_check_branch
          %245 = sbr.rel (%p243) target = $region44
        $region43: #{tpu_custom_call.1} parent=27 // pred_region
          %s246 = smul.u32 %s29, 8
          %s247 = scalar_lea.vmem [#allocation2], %s246
          %v248 = vld [vmem:[%s247] sm:$0xff]
          %v249 = vadd.f32 %v248, %v234
          %250 = vst [vmem:[%s247] sm:$0xff] %v249
        $region44: #{tpu_custom_call.1} parent=27 // pred_fallthru
          _
        %p251 = scmp.eq.s32.totalorder %s28, 1
        // Predicated region
        $region45: #{tpu_custom_call.1} parent=27 // pred_check
          %p252 = pneg %p251
        $region46: #{tpu_custom_call.1} parent=27 // pred_check_branch
          %254 = sbr.rel (%p252) target = $region48
        $region47: #{tpu_custom_call.1} parent=27 // pred_region
          %s255 = smul.u32 %s29, 8
          %s256 = scalar_lea.vmem [#allocation2], %s255
          %v257 = vld [vmem:[%s256] sm:$0xff]
          %258 = vadd.xlane.f32.xlu0 %v257
          %v259 = vpop.xlane.xlu0 %258
          %v260 = vrot.slane %v259, 4
          %v261 = vadd.f32 %v259, %v260
          %v262 = vrot.slane %v261, 2
          %v263 = vadd.f32 %v261, %v262
          %v264 = vrot.slane %v263, 1
          %v265 = vadd.f32 %v263, %v264
          %s266 = vtos %v265
          %v267 = vstv %s266
          %268 = vst [vmem:[%s222] sm:$0xff] %v267
        $region48: #{tpu_custom_call.1} parent=27 // pred_fallthru
          _
        %s269 = sand.u32 %s102, 1
        %s270 = scalar_lea.sflag [#allocation7], %s269
        %s271 = sand.u32 %s102, 1
        %s272 = smul.addr %s271, 8
        %s273 = scalar_lea.vmem [#allocation10], %s272
        // Predicated region
        $region49: #{tpu_custom_call.1} parent=27 // pred_check
          %p274 = pneg %p112
        $region50: #{tpu_custom_call.1} parent=27 // pred_check_branch
          %276 = sbr.rel (%p274) target = $region52
        $region51: #{tpu_custom_call.1} parent=27 // pred_region
          %s278 = ssub.s32 128, 128
          %279 = vsyncadd %s270, %s278
          %s280 = smul.addr %s29, 128
          %s281 = scalar_lea.hbm %s3, %s280
          %s283 = sshll.u32 %s273, 4
          %s284 = int_to_ptr.vmem [resolvable:$true] %s283
          %286 = dma.vmem_to_hbm [thread:$0]  %s284, 128, %s281, %s270
        $region52: #{tpu_custom_call.1} parent=27 // pred_fallthru
          _
      $region28: #{tpu_custom_call.1} parent=5 // pred_fallthru
        _
      %p287 = scmp.le.s32.totalorder 2, %s19
      // Predicated region
      $region53: #{tpu_custom_call.1} parent=5 // pred_check
        %p288 = pneg %p287
      $region54: #{tpu_custom_call.1} parent=5 // pred_check_branch
        %290 = sbr.rel (%p288) target = $region56
      $region55: #{tpu_custom_call.1} parent=5 // pred_region
        %s291 = ssub.s32 %s19, 2
        // Predicated region
        $region57: #{tpu_custom_call.1} parent=55 // pred_check
          %p292 = pneg %p118
        $region58: #{tpu_custom_call.1} parent=55 // pred_check_branch
          %294 = sbr.rel (%p292) target = $region60
        $region59: #{tpu_custom_call.1} parent=55 // pred_region
          %s295 = sand.u32 %s103, 1
          %s296 = scalar_lea.sflag [#allocation7], %s295
          %s297 = sand.u32 %s103, 1
          %s298 = smul.addr %s297, 8
          %s299 = scalar_lea.vmem [#allocation10], %s298
          %300 = dma.done %s296, 128
        $region60: #{tpu_custom_call.1} parent=55 // pred_fallthru
          _
      $region56: #{tpu_custom_call.1} parent=5 // pred_fallthru
        _
    $region6: #{tpu_custom_call.1} parent=1 // loop_footer
      %s23 = sadd.s32 1, %s19
    $region7: #{tpu_custom_call.1} parent=1 // loop_footer_branch
      %18 = sbr.rel target = $region3
    $region8: #{tpu_custom_call.1} parent=1 // loop_exit
      _
    %301 = vsyncpa [#allocation6], 1
    %s302 = scalar_lea.sflag [#allocation6], 1
    %303 = vsyncpa %s302, 1
    %304 = vsyncpa [#allocation9], 1
    %s305 = scalar_lea.sflag [#allocation9], 1
    %306 = vsyncpa %s305, 1
    %307 = vsyncpa [#allocation7], 1
    %s308 = scalar_lea.sflag [#allocation7], 1
    %309 = vsyncpa %s308, 1

</llo_original>
